<compile_context>
chip_gen: v7x
topology: tpu7x:2x2x1
jax: 0.10.0
libtpu: 0.0.40
codegen_flags: <defaults>
</compile_context>

<pallas_src>
import jax
import jax.numpy as jnp
from jax.experimental import pallas as pl
from jax.experimental.pallas import tpu as pltpu


def _mask_kernel(x_ref, w1_ref, w2_ref, o_ref):
    # x_ref : (1, C, T)   channels x spatial tile (NCHW-native, lane-dense T)
    # w1_ref: (Ch, C)     first 1x1 conv weight (out, in)
    # w2_ref: (C, Ch)     second 1x1 conv weight (out, in)
    # o_ref : (1, C, T)
    mxu_dtype = w1_ref.dtype                          # bf16 when wrapper casts weights
    x = x_ref[0].astype(mxu_dtype)                    # (C, T)
    h = jnp.dot(w1_ref[...], x, preferred_element_type=jnp.float32)        # (Ch, T) f32
    h = jnp.maximum(h, 0.0)                                                 # ReLU (f32)
    y = jnp.dot(w2_ref[...], h.astype(mxu_dtype),
                preferred_element_type=jnp.float32)                         # (C, T) f32
    # sigmoid(y) == 0.5 * tanh(y/2) + 0.5  -> one EUP op per output vreg
    o_ref[0] = (0.5 * jnp.tanh(0.5 * y) + 0.5).astype(o_ref.dtype)


def _choose_tile(N, HW, C, itemsize, tile_cap, vmem_budget_bytes):
    """Spatial tile that (a) divides the (at most lane-padded) extent exactly,
    (b) keeps double-buffered in+out blocks within the VMEM budget and
    (c) leaves enough grid steps to feed two TensorCores (v7x)."""
    lane = 128
    # in + out block, each double-buffered -> 4 * C * tile * itemsize bytes.
    budget_cols = max(lane, (vmem_budget_bytes // (4 * C * itemsize)) // lane * lane)
    cap = max(lane, min(tile_cap, budget_cols))

    if HW <= cap:
        # Full-extent spatial block: legal even when HW is not 128-aligned,
        # and needs no HBM pad / slice passes at all.
        tile, hw_pad = HW, HW
    else:
        hw_pad = ((HW + lane - 1) // lane) * lane     # pad at most 127 columns
        m = hw_pad // lane
        best = 1
        for t in range(min(cap // lane, m), 0, -1):
            if m % t == 0:                            # tile divides hw_pad exactly
                best = t
                break
        tile = best * lane

    # Bias toward >= 8 grid steps (v7x has 2 TCs; hides pipeline ramp).
    while (N * (hw_pad // tile) < 8 and tile % 256 == 0 and tile // 2 >= 512
           and hw_pad % (tile // 2) == 0):
        tile //= 2
    return tile, hw_pad


def mask_forward(x_nchw, w1, w2, *, tile_cap=8192, vmem_budget_bytes=12 << 20,
                 mxu_bf16=True):
    """Mask.forward: sigmoid(W2 @ relu(W1 @ x)) over channels of an NCHW tensor.

    x_nchw: (N, C, H, W); w1: (C//r, C); w2: (C, C//r). Returns mask (N, C, H, W).
    """
    N, C, H, W = x_nchw.shape
    Ch = w1.shape[0]
    assert w1.shape == (Ch, C) and w2.shape == (C, Ch)

    HW = H * W
    itemsize = jnp.dtype(x_nchw.dtype).itemsize
    tile, HW_pad = _choose_tile(N, HW, C, itemsize, tile_cap, vmem_budget_bytes)

    # MXU operands in bf16 (tiny weights cast once here; activation tile cast in
    # VMEM inside the kernel). Accumulation stays f32 in the kernel.
    w_dtype = jnp.bfloat16 if mxu_bf16 else w1.dtype
    w1c = w1.astype(w_dtype)
    w2c = w2.astype(w_dtype)

    # NCHW-native: contiguous reshape, no HBM transpose.
    x_r = x_nchw.reshape(N, C, HW)
    if HW_pad != HW:
        x_r = jnp.pad(x_r, ((0, 0), (0, 0), (0, HW_pad - HW)))

    grid = (N, HW_pad // tile)
    vmem_need = 4 * C * tile * itemsize + 8 * Ch * C * 4 + (2 << 20)
    vmem_limit = int(min(max(vmem_need, 16 << 20), 32 << 20))

    out = pl.pallas_call(
        _mask_kernel,
        out_shape=jax.ShapeDtypeStruct((N, C, HW_pad), x_nchw.dtype),
        grid_spec=pltpu.PrefetchScalarGridSpec(
            num_scalar_prefetch=0,
            grid=grid,
            in_specs=[
                pl.BlockSpec((1, C, tile), lambda n, j: (n, 0, j)),
                pl.BlockSpec((Ch, C), lambda n, j: (0, 0)),
                pl.BlockSpec((C, Ch), lambda n, j: (0, 0)),
            ],
            out_specs=pl.BlockSpec((1, C, tile), lambda n, j: (n, 0, j)),
        ),
        compiler_params=pltpu.CompilerParams(
            dimension_semantics=("parallel", "parallel"),
            vmem_limit_bytes=vmem_limit,
        ),
        cost_estimate=pl.CostEstimate(
            flops=4 * N * HW * C * Ch,                 # two thin matmuls
            transcendentals=N * HW * C,                # tanh per output element
            bytes_accessed=2 * N * C * HW * itemsize,  # read x + write mask
        ),
    )(x_r, w1c, w2c)

    if HW_pad != HW:
        out = out[:, :, :HW]
    return out.reshape(N, C, H, W)


def _reference(x_nchw, w1, w2, mxu_dtype=None):
    # Pure-JAX reference (1x1 convs as einsums); mxu_dtype mimics the kernel's
    # bf16 MXU operands with f32 accumulation when set.
    if mxu_dtype is None:
        xd, w1d, w2d = x_nchw, w1, w2
    else:
        xd, w1d, w2d = (x_nchw.astype(mxu_dtype), w1.astype(mxu_dtype),
                        w2.astype(mxu_dtype))
    h = jnp.einsum("nchw,oc->nohw", xd, w1d, preferred_element_type=jnp.float32)
    h = jnp.maximum(h, 0.0)
    h2 = h if mxu_dtype is None else h.astype(mxu_dtype)
    y = jnp.einsum("nohw,ko->nkhw", h2, w2d, preferred_element_type=jnp.float32)
    return jax.nn.sigmoid(y).astype(x_nchw.dtype)


if __name__ == "__main__":
    # Small shapes consistent with the module: dim divisible by r=16.
    N, C, H, W = 2, 64, 16, 16
    r = 16
    Ch = C // r  # 4

    key = jax.random.PRNGKey(0)
    kx, k1, k2 = jax.random.split(key, 3)

    x = jax.random.normal(kx, (N, C, H, W), dtype=jnp.float32)
    # Conv2d(dim, dim//r, 1, bias=False) weight (Ch, C, 1, 1) squeezed -> (Ch, C);
    # Conv2d(dim//r, dim, 1, bias=False) weight squeezed -> (C, Ch).
    w1 = jax.random.normal(k1, (Ch, C), dtype=jnp.float32) * (1.0 / jnp.sqrt(C))
    w2 = jax.random.normal(k2, (C, Ch), dtype=jnp.float32) * (1.0 / jnp.sqrt(Ch))

    out = jax.block_until_ready(mask_forward(x, w1, w2))
    assert out.shape == (N, C, H, W)

    # Tight check vs. a reference using the same bf16 MXU operands, plus a
    # looser sanity check vs. all-f32 math (bounds the bf16-operand error).
    ref_bf16 = _reference(x, w1, w2, mxu_dtype=jnp.bfloat16)
    ref_f32 = _reference(x, w1, w2, mxu_dtype=None)
    assert jnp.allclose(out, ref_bf16, atol=2e-3, rtol=2e-3)
    assert jnp.allclose(out, ref_f32, atol=3e-2, rtol=3e-2)

    print("KERNEL_OK")
</pallas_src>

<mosaic_0001>
module attributes {stable_mosaic.version = 11 : i64} {
  func.func @_mask_kernel(%arg0: i32, %arg1: i32, %arg2: memref<1x64x256xf32, #tpu.memory_space<vmem>>, %arg3: memref<4x64xbf16, #tpu.memory_space<vmem>>, %arg4: memref<64x4xbf16, #tpu.memory_space<vmem>>, %arg5: memref<1x64x256xf32, #tpu.memory_space<vmem>>) attributes {dimension_semantics = [#tpu.dimension_semantics<parallel>, #tpu.dimension_semantics<parallel>], iteration_bounds = array<i64: 2, 1>, scalar_prefetch = 0 : i64, scratch_operands = 0 : i64, tpu.core_type = #tpu.core_type<tc>, window_params = [{transform_indices = @transform_0, window_bounds = array<i64: 1, 64, 256>}, {pipeline_mode = #tpu.pipeline_mode<synchronous>, transform_indices = @transform_1, window_bounds = array<i64: 4, 64>}, {pipeline_mode = #tpu.pipeline_mode<synchronous>, transform_indices = @transform_2, window_bounds = array<i64: 64, 4>}, {transform_indices = @transform_3, window_bounds = array<i64: 1, 64, 256>}]} {
    %c0 = arith.constant 0 : index
    %c0_0 = arith.constant 0 : index
    %c0_1 = arith.constant 0 : index
    %0 = vector.load %arg2[%c0, %c0_0, %c0_1] : memref<1x64x256xf32, #tpu.memory_space<vmem>>, vector<1x64x256xf32>
    %1 = vector.shape_cast %0 : vector<1x64x256xf32> to vector<64x256xf32>
    %2 = arith.truncf %1 : vector<64x256xf32> to vector<64x256xbf16>
    %c0_2 = arith.constant 0 : index
    %c0_3 = arith.constant 0 : index
    %3 = vector.load %arg3[%c0_2, %c0_3] : memref<4x64xbf16, #tpu.memory_space<vmem>>, vector<4x64xbf16>
    %cst = arith.constant dense<0.000000e+00> : vector<4x256xf32>
    %4 = tpu.matmul %3, %2, %cst {dimension_numbers = #tpu.dot_dimension_numbers<[1], [0], [0], [1], [0, 0, 1, 1], [], []>} : vector<4x64xbf16>, vector<64x256xbf16>, vector<4x256xf32> -> vector<4x256xf32>
    %cst_4 = arith.constant 0.000000e+00 : f32
    %5 = vector.broadcast %cst_4 : f32 to vector<4x256xf32>
    %6 = arith.maximumf %4, %5 : vector<4x256xf32>
    %c0_5 = arith.constant 0 : index
    %c0_6 = arith.constant 0 : index
    %7 = vector.load %arg4[%c0_5, %c0_6] : memref<64x4xbf16, #tpu.memory_space<vmem>>, vector<64x4xbf16>
    %8 = arith.truncf %6 : vector<4x256xf32> to vector<4x256xbf16>
    %cst_7 = arith.constant dense<0.000000e+00> : vector<64x256xf32>
    %9 = tpu.matmul %7, %8, %cst_7 {dimension_numbers = #tpu.dot_dimension_numbers<[1], [0], [0], [1], [0, 0, 1, 1], [], []>} : vector<64x4xbf16>, vector<4x256xbf16>, vector<64x256xf32> -> vector<64x256xf32>
    %cst_8 = arith.constant 5.000000e-01 : f32
    %10 = vector.broadcast %cst_8 : f32 to vector<64x256xf32>
    %11 = arith.mulf %10, %9 : vector<64x256xf32>
    %12 = math.tanh %11 : vector<64x256xf32>
    %cst_9 = arith.constant 5.000000e-01 : f32
    %13 = vector.broadcast %cst_9 : f32 to vector<64x256xf32>
    %14 = arith.mulf %13, %12 : vector<64x256xf32>
    %cst_10 = arith.constant 5.000000e-01 : f32
    %15 = vector.broadcast %cst_10 : f32 to vector<64x256xf32>
    %16 = arith.addf %14, %15 : vector<64x256xf32>
    %c0_11 = arith.constant 0 : index
    %c0_12 = arith.constant 0 : index
    %c0_13 = arith.constant 0 : index
    %17 = vector.load %arg5[%c0_11, %c0_12, %c0_13] : memref<1x64x256xf32, #tpu.memory_space<vmem>>, vector<1x64x256xf32>
    %18 = vector.shape_cast %17 : vector<1x64x256xf32> to vector<64x256xf32>
    %19 = vector.shape_cast %16 : vector<64x256xf32> to vector<1x64x256xf32>
    tpu.vector_store %arg5[%c0_11, %c0_12, %c0_13], %19 {strides = array<i32>} : memref<1x64x256xf32, #tpu.memory_space<vmem>>, vector<1x64x256xf32>,
    return
  }
  func.func @transform_0(%arg0: i32, %arg1: i32) -> (i32, i32, i32) {
    %c0_i32 = arith.constant 0 : i32
    %c0_i32_0 = arith.constant 0 : i32
    return %arg0, %c0_i32, %arg1 : i32, i32, i32
  }
  func.func @transform_1(%arg0: i32, %arg1: i32) -> (i32, i32) {
    %c0_i32 = arith.constant 0 : i32
    %c0_i32_0 = arith.constant 0 : i32
    %c0_i32_1 = arith.constant 0 : i32
    return %c0_i32, %c0_i32_0 : i32, i32
  }
  func.func @transform_2(%arg0: i32, %arg1: i32) -> (i32, i32) {
    %c0_i32 = arith.constant 0 : i32
    %c0_i32_0 = arith.constant 0 : i32
    %c0_i32_1 = arith.constant 0 : i32
    return %c0_i32, %c0_i32_0 : i32, i32
  }
  func.func @transform_3(%arg0: i32, %arg1: i32) -> (i32, i32, i32) {
    %c0_i32 = arith.constant 0 : i32
    %c0_i32_0 = arith.constant 0 : i32
    return %arg0, %c0_i32, %arg1 : i32, i32, i32
  }
}

</mosaic_0001>

<llo_original>
// kernel: tpu_custom_call.1
$region0: #{tpu_custom_call.1}
  #allocation0 [shape = 'u32[]', space=smem, size = 0x4, offset = 0x4, fixed_abs, tag = 'smem constant byte address 0x4 - core index']
  #allocation1 [shape = 'u32[144,128]{1,0:T(1,128)}', space=vmem, size = 0x12000, scoped, tag = 'internal scratch']
  %s0 = inlined_call_operand.hbm [shape: f32[2,64,256], index: 0, kind: input, shape index: {}]
  %s1 = inlined_call_operand.vmem [shape: bf16[4,64], index: 1, kind: input, shape index: {}]
  %s2 = inlined_call_operand.vmem [shape: bf16[64,4], index: 2, kind: input, shape index: {}]
  %s3 = inlined_call_operand.hbm [shape: f32[2,64,256], index: 3, kind: output, shape index: {}]
  %s4 = sld [smem:[#allocation0]]
  $region49: #{tpu_custom_call.1} parent=0
    _
  %s6 = ssub.s32 1, %s4
  %s7 = scalar_select 0, %s6, %s4
  $region1: #{tpu_custom_call.1} parent=0
    #allocation2 [shape = 'u8[131072]{0}', space=vmem, size = 0x20000, scoped, tag = 'input window, operand 0']
    #allocation3 [shape = 's32[2]{0}', space=sflag, size = 0x8, scoped, tag = 'scoped memory for tpu_custom_call.1']
    #allocation4 [shape = 's32[2]{0}', space=sflag, size = 0x8, scoped, tag = 'scoped memory for tpu_custom_call.1']
    #allocation5 [shape = 'u8[131072]{0}', space=vmem, size = 0x20000, scoped, tag = 'output window, operand 0']
    %8 = vsyncpa [#allocation3], 0
    %s9 = scalar_lea.sflag [#allocation3], 1
    %10 = vsyncpa %s9, 0
    %11 = vsyncpa [#allocation4], 0
    %s12 = scalar_lea.sflag [#allocation4], 1
    %13 = vsyncpa %s12, 0
    loop: start=0, step=1, limit=4
    $region2: #{tpu_custom_call.1} parent=1 // loop_pre_header
      _
    $region3: #{tpu_custom_call.1} parent=1 // loop_header
      %s15 = sphi 0, %s19
      %p16 = scmp.ge.s32.totalorder %s15, 4
      %s22 = sphi 0, %s34
      %s23 = sphi 0, %s30
      %s24 = sphi 0, %s22
      %s25 = sphi 0, %s23
      %s26 = sphi 0, %s24
      %s27 = sphi 0, %s25
      %s39 = sphi 0, %s41
      %s42 = sphi 0, %s39
      %s43 = sphi 0, %s42
      %s59 = sphi 0, %s43
      %s63 = sphi 0, %s63
      %s65 = sphi 0, %s63
      %s66 = sphi 0, %s65
      %s80 = sphi 0, %s66
      %s84 = sphi 0, %s84
      %s86 = sphi 0, %s84
      %s87 = sphi 0, %s86
      %s101 = sphi 0, %s87
      %s109 = sphi 0, %s111
      %s112 = sphi 0, %s109
      %s113 = sphi 0, %s112
      %s129 = sphi 0, %s113
    $region4: #{tpu_custom_call.1} parent=1 // loop_header_branch
      %18 = sbr.rel (%p16) target = $region8
    $region5: #{tpu_custom_call.1} parent=1 // loop_body
      %s20 = ssub.s32 %s15, 1
      %s21 = ssub.s32 %s15, 2
      %s28 = sadd.s32 1, %s23
      %p29 = scmp.ge.s32.totalorder %s28, 1
      %s30 = scalar_select %p29, 0, %s28
      %s31 = sadd.s32 1, %s22
      %s32 = scalar_select %p29, %s31, %s22
      %p33 = scmp.ge.s32.totalorder %s32, 2
      %s34 = scalar_select %p33, 0, %s32
      %s35 = ssub.s32 %s22, %s34
      %s36 = ssub.s32 %s23, %s30
      %s37 = sor.u32 %s35, %s36
      %p38 = scmp.eq.s32.totalorder %s37, 0
      %s40 = sadd.s32 %s39, 1
      %s41 = scalar_select %p38, %s39, %s40
      %p44 = pneg %p38
      %p45 = scmp.eq.s32.totalorder %s15, 1
      %p46 = por %p44, %p45
      %p47 = scmp.ne.s32.totalorder %s39, %s42
      %p48 = scmp.eq.s32.totalorder %s15, 0
      %p49 = por %p47, %p48
      %p50 = scmp.ne.s32.totalorder %s39, %s42
      %p51 = scmp.eq.s32.totalorder %s20, 1
      %p52 = por %p50, %p51
      %p53 = scmp.ne.s32.totalorder %s42, %s43
      %p54 = scmp.eq.s32.totalorder %s20, 0
      %p55 = por %p53, %p54
      %p56 = scmp.ne.s32.totalorder %s42, %s43
      %p57 = scmp.eq.s32.totalorder %s21, 1
      %p58 = por %p56, %p57
      %p60 = scmp.ne.s32.totalorder %s43, %s59
      %p61 = scmp.eq.s32.totalorder %s21, 0
      %p62 = por %p60, %p61
      %s64 = sadd.s32 %s63, 1
      %p67 = scmp.eq.s32.totalorder %s15, 1
      %p68 = scmp.ne.s32.totalorder %s63, %s65
      %p69 = scmp.eq.s32.totalorder %s15, 0
      %p70 = por %p68, %p69
      %p71 = scmp.ne.s32.totalorder %s63, %s65
      %p72 = scmp.eq.s32.totalorder %s20, 1
      %p73 = por %p71, %p72
      %p74 = scmp.ne.s32.totalorder %s65, %s66
      %p75 = scmp.eq.s32.totalorder %s20, 0
      %p76 = por %p74, %p75
      %p77 = scmp.ne.s32.totalorder %s65, %s66
      %p78 = scmp.eq.s32.totalorder %s21, 1
      %p79 = por %p77, %p78
      %p81 = scmp.ne.s32.totalorder %s66, %s80
      %p82 = scmp.eq.s32.totalorder %s21, 0
      %p83 = por %p81, %p82
      %s85 = sadd.s32 %s84, 1
      %p88 = scmp.eq.s32.totalorder %s15, 1
      %p89 = scmp.ne.s32.totalorder %s84, %s86
      %p90 = scmp.eq.s32.totalorder %s15, 0
      %p91 = por %p89, %p90
      %p92 = scmp.ne.s32.totalorder %s84, %s86
      %p93 = scmp.eq.s32.totalorder %s20, 1
      %p94 = por %p92, %p93
      %p95 = scmp.ne.s32.totalorder %s86, %s87
      %p96 = scmp.eq.s32.totalorder %s20, 0
      %p97 = por %p95, %p96
      %p98 = scmp.ne.s32.totalorder %s86, %s87
      %p99 = scmp.eq.s32.totalorder %s21, 1
      %p100 = por %p98, %p99
      %p102 = scmp.ne.s32.totalorder %s87, %s101
      %p103 = scmp.eq.s32.totalorder %s21, 0
      %p104 = por %p102, %p103
      %s105 = ssub.s32 %s22, %s34
      %s106 = ssub.s32 %s23, %s30
      %s107 = sor.u32 %s105, %s106
      %p108 = scmp.eq.s32.totalorder %s107, 0
      %s110 = sadd.s32 %s109, 1
      %s111 = scalar_select %p108, %s109, %s110
      %p114 = pneg %p108
      %p115 = scmp.eq.s32.totalorder %s15, 1
      %p116 = por %p114, %p115
      %p117 = scmp.ne.s32.totalorder %s109, %s112
      %p118 = scmp.eq.s32.totalorder %s15, 0
      %p119 = por %p117, %p118
      %p120 = scmp.ne.s32.totalorder %s109, %s112
      %p121 = scmp.eq.s32.totalorder %s20, 1
      %p122 = por %p120, %p121
      %p123 = scmp.ne.s32.totalorder %s112, %s113
      %p124 = scmp.eq.s32.totalorder %s20, 0
      %p125 = por %p123, %p124
      %p126 = scmp.ne.s32.totalorder %s112, %s113
      %p127 = scmp.eq.s32.totalorder %s21, 1
      %p128 = por %p126, %p127
      %p130 = scmp.ne.s32.totalorder %s113, %s129
      %p131 = scmp.eq.s32.totalorder %s21, 0
      %p132 = por %p130, %p131
      %p133 = scmp.le.s32.totalorder 1, %s15
      %p134 = scmp.lt.s32.totalorder %s15, 3
      %p135 = pnand %p133, %p134
      %p136 = pneg %p135
      // Predicated region
      $region9: #{tpu_custom_call.1} parent=5 // pred_check
        _
      $region10: #{tpu_custom_call.1} parent=5 // pred_check_branch
        %138 = sbr.rel (%p135) target = $region12
      $region11: #{tpu_custom_call.1} parent=5 // pred_region
        %s139 = ssub.s32 %s15, 1
        // Predicated region
        $region13: #{tpu_custom_call.1} parent=11 // pred_check
          %p140 = pneg %p76
        $region14: #{tpu_custom_call.1} parent=11 // pred_check_branch
          %142 = sbr.rel (%p140) target = $region16
        $region15: #{tpu_custom_call.1} parent=11 // pred_region
          _
        $region16: #{tpu_custom_call.1} parent=11 // pred_fallthru
          _
        // Predicated region
        $region17: #{tpu_custom_call.1} parent=11 // pred_check
          %p143 = pneg %p97
        $region18: #{tpu_custom_call.1} parent=11 // pred_check_branch
          %145 = sbr.rel (%p143) target = $region20
        $region19: #{tpu_custom_call.1} parent=11 // pred_region
          _
        $region20: #{tpu_custom_call.1} parent=11 // pred_fallthru
          _
      $region12: #{tpu_custom_call.1} parent=5 // pred_fallthru
        _
      %p146 = scmp.lt.s32.totalorder %s15, 2
      // Predicated region
      $region21: #{tpu_custom_call.1} parent=5 // pred_check
        %p147 = pneg %p146
      $region22: #{tpu_custom_call.1} parent=5 // pred_check_branch
        %149 = sbr.rel (%p147) target = $region24
      $region23: #{tpu_custom_call.1} parent=5 // pred_region
        // Predicated region
        $region25: #{tpu_custom_call.1} parent=23 // pred_check
          %p150 = pneg %p49
        $region26: #{tpu_custom_call.1} parent=23 // pred_check_branch
          %152 = sbr.rel (%p150) target = $region28
        $region27: #{tpu_custom_call.1} parent=23 // pred_region
          %s153 = sand.u32 %s39, 1
          %s154 = scalar_lea.sflag [#allocation3], %s153
          %s155 = sand.u32 %s39, 1
          %s156 = smul.addr %s155, 128
          %s157 = scalar_lea.vmem [#allocation2], %s156
          %s158 = smul.u32 2, %s23
          %s160 = ssub.s32 2048, 2048
          %161 = vsyncadd %s154, %s160
          %s162 = smul.addr %s22, 16
          %s163 = sadd.s32 %s158, %s162
          %s164 = smul.addr %s163, 128
          %s165 = scalar_lea.hbm %s0, %s164
          %s166 = sshll.u32 %s157, 4
          %s167 = int_to_ptr.vmem [resolvable:$true] %s166
          %172 = dma.hbm_to_vmem [thread:$0]  %s165, 2048, %s167, %s154, 256, 256, 16
        $region28: #{tpu_custom_call.1} parent=23 // pred_fallthru
          _
      $region24: #{tpu_custom_call.1} parent=5 // pred_fallthru
        _
      %p173 = scmp.le.s32.totalorder 1, %s15
      %p174 = scmp.lt.s32.totalorder %s15, 3
      %p175 = pnand %p173, %p174
      %p176 = pneg %p175
      // Predicated region
      $region29: #{tpu_custom_call.1} parent=5 // pred_check
        _
      $region30: #{tpu_custom_call.1} parent=5 // pred_check_branch
        %178 = sbr.rel (%p175) target = $region32
      $region31: #{tpu_custom_call.1} parent=5 // pred_region
        %s179 = ssub.s32 %s15, 1
        %s180 = sand.u32 %s42, 1
        %s181 = scalar_lea.sflag [#allocation3], %s180
        %s182 = sand.u32 %s42, 1
        %s183 = smul.addr %s182, 128
        %s184 = scalar_lea.vmem [#allocation2], %s183
        // Predicated region
        $region33: #{tpu_custom_call.1} parent=31 // pred_check
          %p185 = pneg %p55
        $region34: #{tpu_custom_call.1} parent=31 // pred_check_branch
          %187 = sbr.rel (%p185) target = $region36
        $region35: #{tpu_custom_call.1} parent=31 // pred_region
          %188 = dma.done %s181, 2048
        $region36: #{tpu_custom_call.1} parent=31 // pred_fallthru
          _
        %s189 = sand.u32 %s42, 1
        %s190 = scalar_lea.sflag [#allocation3], %s189
        %s191 = sand.u32 %s42, 1
        %s192 = smul.addr %s191, 128
        %s193 = scalar_lea.vmem [#allocation2], %s192
        %p194 = pneg %p55
        %p195 = pneg %p52
        %p196 = pneg %p76
        %p197 = pneg %p73
        %p198 = pneg %p97
        %p199 = pneg %p94
        %p200 = pneg %p125
        %p201 = pneg %p122
        %s202 = sand.u32 %s112, 1
        %s203 = scalar_lea.sflag [#allocation4], %s202
        %s204 = sand.u32 %s112, 1
        %s205 = smul.addr %s204, 128
        %s206 = scalar_lea.vmem [#allocation5], %s205
        %s207 = smul.u32 2, %s25
        %s208 = smul.u32 2, %s25
        %v210 = vld [vmem:[%s184] sm:$0xff]
        %v211 = vld [vmem:[%s184 + $0x8] sm:$0xff]
        %v212 = vld [vmem:[%s184 + $0x10] sm:$0xff]
        %v213 = vld [vmem:[%s184 + $0x18] sm:$0xff]
        %v214 = vld [vmem:[%s184 + $0x20] sm:$0xff]
        %v215 = vld [vmem:[%s184 + $0x28] sm:$0xff]
        %v216 = vld [vmem:[%s184 + $0x30] sm:$0xff]
        %v217 = vld [vmem:[%s184 + $0x38] sm:$0xff]
        %v218 = vld [vmem:[%s184 + $0x40] sm:$0xff]
        %v219 = vld [vmem:[%s184 + $0x48] sm:$0xff]
        %v220 = vld [vmem:[%s184 + $0x50] sm:$0xff]
        %v221 = vld [vmem:[%s184 + $0x58] sm:$0xff]
        %v222 = vld [vmem:[%s184 + $0x60] sm:$0xff]
        %v223 = vld [vmem:[%s184 + $0x68] sm:$0xff]
        %v224 = vld [vmem:[%s184 + $0x70] sm:$0xff]
        %v225 = vld [vmem:[%s184 + $0x78] sm:$0xff]
        %v226 = vpack.c.bf16 %v212, %v210
        %v227 = vpack.c.bf16 %v213, %v211
        %v228 = vpack.c.bf16 %v216, %v214
        %v229 = vpack.c.bf16 %v217, %v215
        %v230 = vpack.c.bf16 %v220, %v218
        %v231 = vpack.c.bf16 %v221, %v219
        %v232 = vpack.c.bf16 %v224, %v222
        %v233 = vpack.c.bf16 %v225, %v223
        %v234 = vld [vmem:[%s1] sm:$0x3]
        %vm235 = vcmask 523264
        %v237 = vsel %vm235, %v234, 0
        %239 = vmatprep.subr.bf16.mxu0 %v227
        %240 = vmatpush1.bf16.msra.mxu0 %v226
        %241 = vmatprep.subr.bf16.mxu0 %v229
        %242 = vmatpush1.bf16.msra.mxu0 %v228
        %243 = vmatprep.subr.bf16.mxu0 %v231
        %244 = vmatpush1.bf16.msra.mxu0 %v230
        %245 = vmatprep.subr.bf16.mxu0 %v233
        %246 = vmatpush1.bf16.msra.mxu0 %v232
        %247 = vmatprep.subr.bf16.mxu0 0
        %248 = vmatpush1.bf16.msra.mxu0 0
        %249 = vmatprep.subr.bf16.mxu0 0
        %250 = vmatpush1.bf16.msra.mxu0 0
        %251 = vmatprep.subr.bf16.mxu0 0
        %252 = vmatpush1.bf16.msra.mxu0 0
        %253 = vmatprep.subr.bf16.mxu0 0
        %254 = vmatpush1.bf16.msra.mxu0 0
        %255 = vmatprep.subr.bf16.mxu0 0
        %256 = vmatpush1.bf16.msra.mxu0 0
        %257 = vmatprep.subr.bf16.mxu0 0
        %258 = vmatpush1.bf16.msra.mxu0 0
        %259 = vmatprep.subr.bf16.mxu0 0
        %260 = vmatpush1.bf16.msra.mxu0 0
        %261 = vmatprep.subr.bf16.mxu0 0
        %262 = vmatpush1.bf16.msra.mxu0 0
        %263 = vmatprep.subr.bf16.mxu0 0
        %264 = vmatpush1.bf16.msra.mxu0 0
        %265 = vmatprep.subr.bf16.mxu0 0
        %266 = vmatpush1.bf16.msra.mxu0 0
        %267 = vmatprep.subr.bf16.mxu0 0
        %268 = vmatpush1.bf16.msra.mxu0 0
        %269 = vmatprep.subr.bf16.mxu0 0
        %270 = vmatpush1.bf16.msra.mxu0 0
        %271 = vmatprep.mubr.bf16.mxu0 0
        %272 = vmatmul.mubr.bf16.gmra.mrb[0].mxu0 %v237
        %v273 = vpop.f32.mrb[0].mxu0
        %v274 = vadd.f32 0.0, %v273
        %v275 = vpop.f32.mrb[0].mxu0
        %v276 = vadd.f32 0.0, %v275
        %v277 = vpop.f32.mrb[0].mxu0
        %v278 = vpop.f32.mrb[0].mxu0
        %279 = vdwg.mxu0
        %v280 = vmax.f32 %v274, 0.0
        %v281 = vmax.f32 %v276, 0.0
        %v282 = vld [vmem:[%s2] sm:$0xf]
        %v283 = vld [vmem:[%s2 + $0x4] sm:$0xf]
        %v284 = vld [vmem:[%s2 + $0x8] sm:$0xf]
        %v285 = vld [vmem:[%s2 + $0xc] sm:$0xf]
        %v286 = vld [vmem:[%s2 + $0x10] sm:$0xf]
        %v287 = vld [vmem:[%s2 + $0x14] sm:$0xf]
        %v288 = vld [vmem:[%s2 + $0x18] sm:$0xf]
        %v289 = vld [vmem:[%s2 + $0x1c] sm:$0xf]
        %v290 = vpack.c.bf16 %v280, %v280
        %v291 = vpack.c.bf16 %v281, %v281
        %v300 = vunpack.c.l.b16 %v282
        %v301 = vunpack.c.l.b16 %v283
        %v302 = vunpack.c.l.b16 %v284
        %v303 = vunpack.c.l.b16 %v285
        %v304 = vunpack.c.l.b16 %v286
        %v305 = vunpack.c.l.b16 %v287
        %v306 = vunpack.c.l.b16 %v288
        %v307 = vunpack.c.l.b16 %v289
        %v308 = vpack.c.b16 %v301, %v300
        %v309 = vpack.c.b16 %v303, %v302
        %v310 = vpack.c.b16 %v305, %v304
        %v311 = vpack.c.b16 %v307, %v306
        %vm312 = vcmask 31744
        %v314 = vsel %vm312, %v308, 0
        %v317 = vsel %vm312, %v309, 0
        %v320 = vsel %vm312, %v310, 0
        %v323 = vsel %vm312, %v311, 0
        %vm325 = vcmask 1041408
        %v327 = vsel %vm325, %v290, 0
        %v330 = vsel %vm325, %v291, 0
        %332 = vmatprep.subr.bf16.mxu0 %v330
        %333 = vmatpush1.bf16.msra.mxu0 %v327
        %334 = vmatprep.subr.bf16.mxu0 0
        %335 = vmatpush1.bf16.msra.mxu0 0
        %336 = vmatprep.subr.bf16.mxu0 0
        %337 = vmatpush1.bf16.msra.mxu0 0
        %338 = vmatprep.subr.bf16.mxu0 0
        %339 = vmatpush1.bf16.msra.mxu0 0
        %340 = vmatprep.subr.bf16.mxu0 0
        %341 = vmatpush1.bf16.msra.mxu0 0
        %342 = vmatprep.subr.bf16.mxu0 0
        %343 = vmatpush1.bf16.msra.mxu0 0
        %344 = vmatprep.subr.bf16.mxu0 0
        %345 = vmatpush1.bf16.msra.mxu0 0
        %346 = vmatprep.subr.bf16.mxu0 0
        %347 = vmatpush1.bf16.msra.mxu0 0
        %348 = vmatprep.subr.bf16.mxu0 0
        %349 = vmatpush1.bf16.msra.mxu0 0
        %350 = vmatprep.subr.bf16.mxu0 0
        %351 = vmatpush1.bf16.msra.mxu0 0
        %352 = vmatprep.subr.bf16.mxu0 0
        %353 = vmatpush1.bf16.msra.mxu0 0
        %354 = vmatprep.subr.bf16.mxu0 0
        %355 = vmatpush1.bf16.msra.mxu0 0
        %356 = vmatprep.subr.bf16.mxu0 0
        %357 = vmatpush1.bf16.msra.mxu0 0
        %358 = vmatprep.subr.bf16.mxu0 0
        %359 = vmatpush1.bf16.msra.mxu0 0
        %360 = vmatprep.subr.bf16.mxu0 0
        %361 = vmatpush1.bf16.msra.mxu0 0
        %362 = vmatprep.subr.bf16.mxu0 0
        %363 = vmatpush1.bf16.msra.mxu0 0
        %364 = vmatprep.mubr.bf16.mxu0 0
        %365 = vmatmul.mubr.bf16.gmra.mrb[0].mxu0 %v314
        %v366 = vpop.f32.mrb[0].mxu0
        %v367 = vadd.f32 0.0, %v366
        %v368 = vpop.f32.mrb[0].mxu0
        %v369 = vadd.f32 0.0, %v368
        %v370 = vpop.f32.mrb[0].mxu0
        %v371 = vadd.f32 0.0, %v370
        %v372 = vpop.f32.mrb[0].mxu0
        %v373 = vadd.f32 0.0, %v372
        %374 = vmatprep.mubr.bf16.mxu0 0
        %375 = vmatmul.mubr.bf16.gmra.mrb[0].mxu0 %v317
        %v376 = vpop.f32.mrb[0].mxu0
        %v377 = vadd.f32 0.0, %v376
        %v378 = vpop.f32.mrb[0].mxu0
        %v379 = vadd.f32 0.0, %v378
        %v380 = vpop.f32.mrb[0].mxu0
        %v381 = vadd.f32 0.0, %v380
        %v382 = vpop.f32.mrb[0].mxu0
        %v383 = vadd.f32 0.0, %v382
        %384 = vmatprep.mubr.bf16.mxu0 0
        %385 = vmatmul.mubr.bf16.gmra.mrb[0].mxu0 %v320
        %v386 = vpop.f32.mrb[0].mxu0
        %v387 = vadd.f32 0.0, %v386
        %v388 = vpop.f32.mrb[0].mxu0
        %v389 = vadd.f32 0.0, %v388
        %v390 = vpop.f32.mrb[0].mxu0
        %v391 = vadd.f32 0.0, %v390
        %v392 = vpop.f32.mrb[0].mxu0
        %v393 = vadd.f32 0.0, %v392
        %394 = vmatprep.mubr.bf16.mxu0 0
        %395 = vmatmul.mubr.bf16.gmra.mrb[0].mxu0 %v323
        %v396 = vpop.f32.mrb[0].mxu0
        %v397 = vadd.f32 0.0, %v396
        %v398 = vpop.f32.mrb[0].mxu0
        %v399 = vadd.f32 0.0, %v398
        %v400 = vpop.f32.mrb[0].mxu0
        %v401 = vadd.f32 0.0, %v400
        %v402 = vpop.f32.mrb[0].mxu0
        %v403 = vadd.f32 0.0, %v402
        %404 = vdwg.mxu0
        %v405 = vmul.f32 %v367, 0.5
        %v406 = vmul.f32 %v369, 0.5
        %v407 = vmul.f32 %v371, 0.5
        %v408 = vmul.f32 %v373, 0.5
        %v409 = vmul.f32 %v377, 0.5
        %v410 = vmul.f32 %v379, 0.5
        %v411 = vmul.f32 %v381, 0.5
        %v412 = vmul.f32 %v383, 0.5
        %v413 = vmul.f32 %v387, 0.5
        %v414 = vmul.f32 %v389, 0.5
        %v415 = vmul.f32 %v391, 0.5
        %v416 = vmul.f32 %v393, 0.5
        %v417 = vmul.f32 %v397, 0.5
        %v418 = vmul.f32 %v399, 0.5
        %v419 = vmul.f32 %v401, 0.5
        %v420 = vmul.f32 %v403, 0.5
        %v421 = vtanh.pop %v405
        %v422 = vtanh.pop %v406
        %v423 = vtanh.pop %v407
        %v424 = vtanh.pop %v408
        %v425 = vtanh.pop %v409
        %v426 = vtanh.pop %v410
        %v427 = vtanh.pop %v411
        %v428 = vtanh.pop %v412
        %v429 = vtanh.pop %v413
        %v430 = vtanh.pop %v414
        %v431 = vtanh.pop %v415
        %v432 = vtanh.pop %v416
        %v433 = vtanh.pop %v417
        %v434 = vtanh.pop %v418
        %v435 = vtanh.pop %v419
        %v436 = vtanh.pop %v420
        %v437 = vmul.f32 %v421, 0.5
        %v438 = vmul.f32 %v422, 0.5
        %v439 = vmul.f32 %v423, 0.5
        %v440 = vmul.f32 %v424, 0.5
        %v441 = vmul.f32 %v425, 0.5
        %v442 = vmul.f32 %v426, 0.5
        %v443 = vmul.f32 %v427, 0.5
        %v444 = vmul.f32 %v428, 0.5
        %v445 = vmul.f32 %v429, 0.5
        %v446 = vmul.f32 %v430, 0.5
        %v447 = vmul.f32 %v431, 0.5
        %v448 = vmul.f32 %v432, 0.5
        %v449 = vmul.f32 %v433, 0.5
        %v450 = vmul.f32 %v434, 0.5
        %v451 = vmul.f32 %v435, 0.5
        %v452 = vmul.f32 %v436, 0.5
        %v453 = vadd.f32 %v437, 0.5
        %v454 = vadd.f32 %v438, 0.5
        %v455 = vadd.f32 %v439, 0.5
        %v456 = vadd.f32 %v440, 0.5
        %v457 = vadd.f32 %v441, 0.5
        %v458 = vadd.f32 %v442, 0.5
        %v459 = vadd.f32 %v443, 0.5
        %v460 = vadd.f32 %v444, 0.5
        %v461 = vadd.f32 %v445, 0.5
        %v462 = vadd.f32 %v446, 0.5
        %v463 = vadd.f32 %v447, 0.5
        %v464 = vadd.f32 %v448, 0.5
        %v465 = vadd.f32 %v449, 0.5
        %v466 = vadd.f32 %v450, 0.5
        %v467 = vadd.f32 %v451, 0.5
        %v468 = vadd.f32 %v452, 0.5
        %469 = vst [vmem:[%s206] sm:$0xff] %v453
        %470 = vst [vmem:[%s206 + $0x8] sm:$0xff] %v454
        %471 = vst [vmem:[%s206 + $0x10] sm:$0xff] %v455
        %472 = vst [vmem:[%s206 + $0x18] sm:$0xff] %v456
        %473 = vst [vmem:[%s206 + $0x20] sm:$0xff] %v457
        %474 = vst [vmem:[%s206 + $0x28] sm:$0xff] %v458
        %475 = vst [vmem:[%s206 + $0x30] sm:$0xff] %v459
        %476 = vst [vmem:[%s206 + $0x38] sm:$0xff] %v460
        %477 = vst [vmem:[%s206 + $0x40] sm:$0xff] %v461
        %478 = vst [vmem:[%s206 + $0x48] sm:$0xff] %v462
        %479 = vst [vmem:[%s206 + $0x50] sm:$0xff] %v463
        %480 = vst [vmem:[%s206 + $0x58] sm:$0xff] %v464
        %481 = vst [vmem:[%s206 + $0x60] sm:$0xff] %v465
        %482 = vst [vmem:[%s206 + $0x68] sm:$0xff] %v466
        %483 = vst [vmem:[%s206 + $0x70] sm:$0xff] %v467
        %484 = vst [vmem:[%s206 + $0x78] sm:$0xff] %v468
        %s485 = sand.u32 %s112, 1
        %s486 = scalar_lea.sflag [#allocation4], %s485
        %s487 = sand.u32 %s112, 1
        %s488 = smul.addr %s487, 128
        %s489 = scalar_lea.vmem [#allocation5], %s488
        // Predicated region
        $region37: #{tpu_custom_call.1} parent=31 // pred_check
          %p490 = pneg %p122
        $region38: #{tpu_custom_call.1} parent=31 // pred_check_branch
          %492 = sbr.rel (%p490) target = $region40
        $region39: #{tpu_custom_call.1} parent=31 // pred_region
          %s493 = smul.u32 2, %s25
          %s495 = ssub.s32 2048, 2048
          %496 = vsyncadd %s486, %s495
          %s497 = smul.addr %s24, 16
          %s498 = sadd.s32 %s493, %s497
          %s499 = smul.addr %s498, 128
          %s500 = scalar_lea.hbm %s3, %s499
          %s501 = sshll.u32 %s489, 4
          %s502 = int_to_ptr.vmem [resolvable:$true] %s501
          %507 = dma.vmem_to_hbm [thread:$0]  %s502, 2048, %s500, %s486, 256, 256, 16
        $region40: #{tpu_custom_call.1} parent=31 // pred_fallthru
          _
      $region32: #{tpu_custom_call.1} parent=5 // pred_fallthru
        _
      %p508 = scmp.le.s32.totalorder 2, %s15
      // Predicated region
      $region41: #{tpu_custom_call.1} parent=5 // pred_check
        %p509 = pneg %p508
      $region42: #{tpu_custom_call.1} parent=5 // pred_check_branch
        %511 = sbr.rel (%p509) target = $region44
      $region43: #{tpu_custom_call.1} parent=5 // pred_region
        %s512 = ssub.s32 %s15, 2
        // Predicated region
        $region45: #{tpu_custom_call.1} parent=43 // pred_check
          %p513 = pneg %p128
        $region46: #{tpu_custom_call.1} parent=43 // pred_check_branch
          %515 = sbr.rel (%p513) target = $region48
        $region47: #{tpu_custom_call.1} parent=43 // pred_region
          %s516 = sand.u32 %s113, 1
          %s517 = scalar_lea.sflag [#allocation4], %s516
          %s518 = sand.u32 %s113, 1
          %s519 = smul.addr %s518, 128
          %s520 = scalar_lea.vmem [#allocation5], %s519
          %521 = dma.done %s517, 2048
        $region48: #{tpu_custom_call.1} parent=43 // pred_fallthru
          _
      $region44: #{tpu_custom_call.1} parent=5 // pred_fallthru
        _
    $region6: #{tpu_custom_call.1} parent=1 // loop_footer
      %s19 = sadd.s32 1, %s15
    $region7: #{tpu_custom_call.1} parent=1 // loop_footer_branch
      %14 = sbr.rel target = $region3
    $region8: #{tpu_custom_call.1} parent=1 // loop_exit
      _
    %522 = vsyncpa [#allocation3], 1
    %s523 = scalar_lea.sflag [#allocation3], 1
    %524 = vsyncpa %s523, 1
    %525 = vsyncpa [#allocation4], 1
    %s526 = scalar_lea.sflag [#allocation4], 1
    %527 = vsyncpa %s526, 1

</llo_original>
